<compile_context>
chip_gen: v6e
topology: v6e:2x2x1
jax: 0.10.0
libtpu: 0.0.40
codegen_flags: <defaults>
</compile_context>

<pallas_src>
import numpy as np
import jax
import jax.numpy as jnp
from jax.experimental import pallas as pl
from jax.experimental.pallas import tpu as pltpu


_CHANNEL_INDEX = 3                      # MONAI channel_indices=3
_VMEM_TILE_BUDGET = 10 * 1024 * 1024    # soft per-call VMEM budget for tile sizing
_MAX_TILE_ROWS = 32                     # hard cap on H-tile height


def _pick_tile_rows(n, cap, step=1):
    """Largest multiple of `step` that divides `n` and is <= cap (fallback: n)."""
    cap = max(step, min(cap, n))
    cap -= cap % step
    for t in range(cap, 0, -step):
        if n % t == 0:
            return t
    # TODO(synk): for huge H with no multiple-of-8 divisor <= cap, add a
    # remainder-masked cdiv grid instead of falling back to a single full tile.
    return n


# ----------------------------------------------------------------------------
# Kernel 1: per-axis foreground projections of the channel-3 slab, tiled over H
# ----------------------------------------------------------------------------
def _foreground_projection_kernel(x_ref, ph_ref, pw_ref, pd_ref):
    i = pl.program_id(0)
    x = x_ref[...]                                     # (TILE_H, W, D) native dtype
    m_hw = jnp.max(x, axis=2)                          # (TILE_H, W)  max over D
    # Per-H-row projection: fully reduced within its own tile -> blocked write.
    ph_ref[...] = jnp.max(m_hw, axis=1, keepdims=True)            # (TILE_H, 1)

    # Running max across H tiles for the W / D projections (resident output
    # blocks).  Zero-init is safe: projections are only compared against "> 0".
    @pl.when(i == 0)
    def _init():
        pw_ref[...] = jnp.zeros_like(pw_ref)
        pd_ref[...] = jnp.zeros_like(pd_ref)

    pw_ref[...] = jnp.maximum(pw_ref[...],
                              jnp.max(m_hw, axis=0, keepdims=True))   # (1, W)
    m_wd = jnp.max(x, axis=0)                                         # (W, D)
    pd_ref[...] = jnp.maximum(pd_ref[...],
                              jnp.max(m_wd, axis=0, keepdims=True))   # (1, D)


@jax.jit
def _bbox_bounds_device(images):
    """Bounding box of channel-3 foreground as one (6,) int32: [h0,h1,w0,w1,d0,d1]."""
    C, H, W, D = images.shape
    dt = images.dtype
    itemsize = jnp.dtype(dt).itemsize
    cap = max(8, int(_VMEM_TILE_BUDGET // (2 * W * D * itemsize)))  # 2x: double buffer
    tile_h = _pick_tile_rows(H, cap=min(cap, _MAX_TILE_ROWS), step=8)
    nh = H // tile_h

    ph, pw, pd = pl.pallas_call(
        _foreground_projection_kernel,
        grid=(nh,),
        in_specs=[
            # Channel axis squeezed and pinned to the bbox channel: only the
            # channel-3 slab is ever read from HBM, in its native dtype.
            pl.BlockSpec((pl.Squeezed(), tile_h, W, D),
                         lambda i: (_CHANNEL_INDEX, i, 0, 0)),
        ],
        out_specs=[
            pl.BlockSpec((tile_h, 1), lambda i: (i, 0)),  # per-row max, blocked over H
            pl.BlockSpec((1, W), lambda i: (0, 0)),       # resident accumulator
            pl.BlockSpec((1, D), lambda i: (0, 0)),       # resident accumulator
        ],
        out_shape=(
            jax.ShapeDtypeStruct((H, 1), dt),
            jax.ShapeDtypeStruct((1, W), dt),
            jax.ShapeDtypeStruct((1, D), dt),
        ),
        compiler_params=pltpu.CompilerParams(dimension_semantics=("arbitrary",)),
    )(images)

    # Tiny on-device post-process -> single (6,) transfer to host.
    bounds = []
    for vec, n in ((ph.reshape(H), H), (pw.reshape(W), W), (pd.reshape(D), D)):
        fg = vec > 0                            # select_fn(x) = x > 0
        any_fg = jnp.any(fg)
        idx = jnp.arange(n, dtype=jnp.int32)
        first = jnp.min(jnp.where(fg, idx, n))
        last = jnp.max(jnp.where(fg, idx, -1))
        bounds.append(jnp.where(any_fg, first, 0))
        bounds.append(jnp.where(any_fg, last + 1, 0))
    return jnp.stack(bounds).astype(jnp.int32)


# ----------------------------------------------------------------------------
# Kernel 2: fused crop of images + segmentations, tiled over output H rows
# ----------------------------------------------------------------------------
def _crop_pair_pallas(images, segmentations, start, end):
    Ci, H, W, D = images.shape
    Cs = segmentations.shape[0]
    s0, s1, s2 = (int(v) for v in start)
    e0, e1, e2 = (int(v) for v in end)
    Ho, Wo, Do = e0 - s0, e1 - s1, e2 - s2

    if min(Ho, Wo, Do) <= 0:
        # TODO(synk): empty foreground box -> zero-sized crop; Pallas cannot emit
        # zero-sized blocks, so fall back to plain XLA slicing (same as MONAI).
        return (images[:, s0:e0, s1:e1, s2:e2],
                segmentations[:, s0:e0, s1:e1, s2:e2])

    isz = jnp.dtype(images.dtype).itemsize
    ssz = jnp.dtype(segmentations.dtype).itemsize
    # Per-output-row VMEM cost: uncropped-W/D scratch + double-buffered out tiles.
    row_bytes = (Ci * isz + Cs * ssz) * (W * D + 2 * Wo * Do)
    cap = max(1, int(_VMEM_TILE_BUDGET // max(1, row_bytes)))
    tile_h = _pick_tile_rows(Ho, cap=min(cap, _MAX_TILE_ROWS), step=1)
    nh = Ho // tile_h                       # exact: tile_h divides Ho

    def crop_kernel(img_hbm, seg_hbm, img_out, seg_out, img_buf, seg_buf, sems):
        h = pl.program_id(0)
        row0 = s0 + h * tile_h              # first source row of this output tile
        # DMA only the rows inside the H crop window (offset on an untiled axis);
        # W/D stay full here and are cropped below with a static VMEM slice.
        img_cp = pltpu.make_async_copy(
            img_hbm.at[:, pl.ds(row0, tile_h), :, :], img_buf, sems.at[0])
        seg_cp = pltpu.make_async_copy(
            seg_hbm.at[:, pl.ds(row0, tile_h), :, :], seg_buf, sems.at[1])
        img_cp.start()
        seg_cp.start()
        img_cp.wait()
        img_out[...] = img_buf[:, :, s1:e1, s2:e2]
        seg_cp.wait()
        seg_out[...] = seg_buf[:, :, s1:e1, s2:e2]

    return pl.pallas_call(
        crop_kernel,
        grid=(nh,),
        in_specs=[pl.BlockSpec(memory_space=pl.ANY),
                  pl.BlockSpec(memory_space=pl.ANY)],
        out_specs=[pl.BlockSpec((Ci, tile_h, Wo, Do), lambda h: (0, h, 0, 0)),
                   pl.BlockSpec((Cs, tile_h, Wo, Do), lambda h: (0, h, 0, 0))],
        out_shape=(jax.ShapeDtypeStruct((Ci, Ho, Wo, Do), images.dtype),
                   jax.ShapeDtypeStruct((Cs, Ho, Wo, Do), segmentations.dtype)),
        scratch_shapes=[pltpu.VMEM((Ci, tile_h, W, D), images.dtype),
                        pltpu.VMEM((Cs, tile_h, W, D), segmentations.dtype),
                        pltpu.SemaphoreType.DMA((2,))],
        compiler_params=pltpu.CompilerParams(dimension_semantics=("parallel",)),
    )(images, segmentations)


# ----------------------------------------------------------------------------
# Module equivalent
# ----------------------------------------------------------------------------
class CropBackground:
    """Pallas TPU equivalent of bras.utils.image.CropBackground.

    CropForeground(select_fn=lambda x: x > 0, margin=0, channel_indices=3):
    the bounding box is computed from channel 3 of `images`; both `images` and
    `segmentations` are cropped to that box.
    """

    def compute_bounding_box(self, images):
        bounds = np.asarray(_bbox_bounds_device(images))   # single (6,) D2H transfer
        bbox_start = (int(bounds[0]), int(bounds[2]), int(bounds[4]))
        bbox_end = (int(bounds[1]), int(bounds[3]), int(bounds[5]))
        return bbox_start, bbox_end

    def __call__(self, batch, *_):
        images, segmentations = batch
        bbox_start, bbox_end = self.compute_bounding_box(images)
        # NOTE: the PyTorch module prints the bbox here; omitted so stdout only
        # contains the final "KERNEL_OK".
        cropped_images, cropped_segmentation = _crop_pair_pallas(
            images, segmentations, bbox_start, bbox_end)
        return (cropped_images, cropped_segmentation)


# ----------------------------------------------------------------------------
# Demo / self-check
# ----------------------------------------------------------------------------
def _build_case(key, shape, blob_slices):
    C, H, W, D = shape
    k_img, k_blob, k_seg = jax.random.split(key, 3)
    images = jax.random.normal(k_img, (C, H, W, D), dtype=jnp.float32)
    hs, ws, ds = blob_slices
    blob_shape = (hs.stop - hs.start, ws.stop - ws.start, ds.stop - ds.start)
    blob = jnp.abs(jax.random.normal(k_blob, blob_shape, dtype=jnp.float32)) + 0.5
    ch3 = jnp.zeros((H, W, D), jnp.float32).at[hs, ws, ds].set(blob)
    images = images.at[_CHANNEL_INDEX].set(ch3)
    segmentations = jax.random.randint(k_seg, (3, H, W, D), 0, 2, dtype=jnp.int32)
    return images, segmentations


def _reference(images, segmentations):
    img = np.asarray(images)
    seg = np.asarray(segmentations)
    mask = img[_CHANNEL_INDEX] > 0
    start, end = [], []
    for ax in range(3):
        other = tuple(a for a in range(3) if a != ax)
        idx = np.nonzero(mask.any(axis=other))[0]
        if idx.size == 0:
            start.append(0)
            end.append(0)
        else:
            start.append(int(idx[0]))
            end.append(int(idx[-1]) + 1)
    sl = (slice(None),) + tuple(slice(s, e) for s, e in zip(start, end))
    return img[sl], seg[sl]


if __name__ == "__main__":
    model = CropBackground()
    key = jax.random.PRNGKey(0)
    k1, k2 = jax.random.split(key)

    cases = [
        # small BraTS-like volume (single-tile grids)
        ((4, 16, 16, 8), (slice(4, 12), slice(3, 13), slice(2, 7))),
        # taller volume: 2 projection tiles (32 rows each) + 2 crop tiles
        # (20 rows each) -> exercises the running-max accumulators and the
        # multi-step manual-DMA crop.
        ((4, 64, 16, 8), (slice(5, 45), slice(3, 13), slice(2, 7))),
    ]

    for case_key, (shape, blob) in zip((k1, k2), cases):
        images, segmentations = _build_case(case_key, shape, blob)
        cropped_images, cropped_segmentation = model((images, segmentations))
        jax.block_until_ready(cropped_images)
        jax.block_until_ready(cropped_segmentation)

        ref_img, ref_seg = _reference(images, segmentations)
        assert cropped_images.shape == ref_img.shape, (cropped_images.shape,
                                                       ref_img.shape)
        assert cropped_segmentation.shape == ref_seg.shape
        np.testing.assert_array_equal(np.asarray(cropped_images), ref_img)
        np.testing.assert_array_equal(np.asarray(cropped_segmentation), ref_seg)

    assert cropped_images.shape == (4, 40, 10, 5)
    print("KERNEL_OK")
</pallas_src>

<mosaic_0001>
module attributes {stable_mosaic.version = 11 : i64} {
  func.func @_foreground_projection_kernel(%arg0: i32, %arg1: memref<1x16x16x8xf32, #tpu.memory_space<vmem>>, %arg2: memref<16x1xf32, #tpu.memory_space<vmem>>, %arg3: memref<1x16xf32, #tpu.memory_space<vmem>>, %arg4: memref<1x8xf32, #tpu.memory_space<vmem>>) attributes {dimension_semantics = [#tpu.dimension_semantics<arbitrary>], iteration_bounds = array<i64: 1>, scalar_prefetch = 0 : i64, scratch_operands = 0 : i64, tpu.core_type = #tpu.core_type<tc>, window_params = [{transform_indices = @transform_0, window_bounds = array<i64: 1, 16, 16, 8>}, {transform_indices = @transform_1, window_bounds = array<i64: 16, 1>}, {pipeline_mode = #tpu.pipeline_mode<synchronous>, transform_indices = @transform_2, window_bounds = array<i64: 1, 16>}, {pipeline_mode = #tpu.pipeline_mode<synchronous>, transform_indices = @transform_3, window_bounds = array<i64: 1, 8>}]} {
    %c0 = arith.constant 0 : index
    %c0_0 = arith.constant 0 : index
    %c0_1 = arith.constant 0 : index
    %c0_2 = arith.constant 0 : index
    %0 = vector.load %arg1[%c0, %c0_0, %c0_1, %c0_2] : memref<1x16x16x8xf32, #tpu.memory_space<vmem>>, vector<1x16x16x8xf32>
    %1 = vector.shape_cast %0 : vector<1x16x16x8xf32> to vector<16x16x8xf32>
    %cst = arith.constant dense<0xFF800000> : vector<16x16xf32>
    %2 = vector.multi_reduction <maximumf>, %1, %cst [2] : vector<16x16x8xf32> to vector<16x16xf32>
    %cst_3 = arith.constant dense<0xFF800000> : vector<16xf32>
    %3 = vector.multi_reduction <maximumf>, %2, %cst_3 [1] : vector<16x16xf32> to vector<16xf32>
    %4 = vector.shape_cast %3 : vector<16xf32> to vector<16x1xf32>
    %c0_4 = arith.constant 0 : index
    %c0_5 = arith.constant 0 : index
    %5 = vector.load %arg2[%c0_4, %c0_5] : memref<16x1xf32, #tpu.memory_space<vmem>>, vector<16x1xf32>
    tpu.vector_store %arg2[%c0_4, %c0_5], %4 {strides = array<i32>} : memref<16x1xf32, #tpu.memory_space<vmem>>, vector<16x1xf32>,
    %c0_i32 = arith.constant 0 : i32
    %6 = arith.cmpi eq, %arg0, %c0_i32 : i32
    %7 = arith.extui %6 : i1 to i32
    %c0_i32_6 = arith.constant 0 : i32
    %8 = arith.cmpi ne, %7, %c0_i32_6 : i32
    scf.if %8 {
      %cst_18 = arith.constant 0.000000e+00 : f32
      %20 = vector.broadcast %cst_18 : f32 to vector<1x16xf32>
      %c0_19 = arith.constant 0 : index
      %c0_20 = arith.constant 0 : index
      %21 = vector.load %arg3[%c0_19, %c0_20] : memref<1x16xf32, #tpu.memory_space<vmem>>, vector<1x16xf32>
      tpu.vector_store %arg3[%c0_19, %c0_20], %20 {strides = array<i32>} : memref<1x16xf32, #tpu.memory_space<vmem>>, vector<1x16xf32>,
      %cst_21 = arith.constant 0.000000e+00 : f32
      %22 = vector.broadcast %cst_21 : f32 to vector<1x8xf32>
      %c0_22 = arith.constant 0 : index
      %c0_23 = arith.constant 0 : index
      %23 = vector.load %arg4[%c0_22, %c0_23] : memref<1x8xf32, #tpu.memory_space<vmem>>, vector<1x8xf32>
      tpu.vector_store %arg4[%c0_22, %c0_23], %22 {strides = array<i32>} : memref<1x8xf32, #tpu.memory_space<vmem>>, vector<1x8xf32>,
    } else {
    }
    %c0_7 = arith.constant 0 : index
    %c0_8 = arith.constant 0 : index
    %9 = vector.load %arg3[%c0_7, %c0_8] : memref<1x16xf32, #tpu.memory_space<vmem>>, vector<1x16xf32>
    %cst_9 = arith.constant dense<0xFF800000> : vector<16xf32>
    %10 = vector.multi_reduction <maximumf>, %2, %cst_9 [0] : vector<16x16xf32> to vector<16xf32>
    %11 = vector.shape_cast %10 : vector<16xf32> to vector<1x16xf32>
    %12 = arith.maximumf %9, %11 : vector<1x16xf32>
    %c0_10 = arith.constant 0 : index
    %c0_11 = arith.constant 0 : index
    %13 = vector.load %arg3[%c0_10, %c0_11] : memref<1x16xf32, #tpu.memory_space<vmem>>, vector<1x16xf32>
    tpu.vector_store %arg3[%c0_10, %c0_11], %12 {strides = array<i32>} : memref<1x16xf32, #tpu.memory_space<vmem>>, vector<1x16xf32>,
    %cst_12 = arith.constant dense<0xFF800000> : vector<16x8xf32>
    %14 = vector.multi_reduction <maximumf>, %1, %cst_12 [0] : vector<16x16x8xf32> to vector<16x8xf32>
    %c0_13 = arith.constant 0 : index
    %c0_14 = arith.constant 0 : index
    %15 = vector.load %arg4[%c0_13, %c0_14] : memref<1x8xf32, #tpu.memory_space<vmem>>, vector<1x8xf32>
    %cst_15 = arith.constant dense<0xFF800000> : vector<8xf32>
    %16 = vector.multi_reduction <maximumf>, %14, %cst_15 [0] : vector<16x8xf32> to vector<8xf32>
    %17 = vector.shape_cast %16 : vector<8xf32> to vector<1x8xf32>
    %18 = arith.maximumf %15, %17 : vector<1x8xf32>
    %c0_16 = arith.constant 0 : index
    %c0_17 = arith.constant 0 : index
    %19 = vector.load %arg4[%c0_16, %c0_17] : memref<1x8xf32, #tpu.memory_space<vmem>>, vector<1x8xf32>
    tpu.vector_store %arg4[%c0_16, %c0_17], %18 {strides = array<i32>} : memref<1x8xf32, #tpu.memory_space<vmem>>, vector<1x8xf32>,
    return
  }
  func.func @transform_0(%arg0: i32) -> (i32, i32, i32, i32) {
    %c3_i32 = arith.constant 3 : i32
    %c0_i32 = arith.constant 0 : i32
    %c0_i32_0 = arith.constant 0 : i32
    %c0_i32_1 = arith.constant 0 : i32
    return %c3_i32, %arg0, %c0_i32, %c0_i32_0 : i32, i32, i32, i32
  }
  func.func @transform_1(%arg0: i32) -> (i32, i32) {
    %c0_i32 = arith.constant 0 : i32
    %c0_i32_0 = arith.constant 0 : i32
    return %arg0, %c0_i32 : i32, i32
  }
  func.func @transform_2(%arg0: i32) -> (i32, i32) {
    %c0_i32 = arith.constant 0 : i32
    %c0_i32_0 = arith.constant 0 : i32
    %c0_i32_1 = arith.constant 0 : i32
    return %c0_i32, %c0_i32_0 : i32, i32
  }
  func.func @transform_3(%arg0: i32) -> (i32, i32) {
    %c0_i32 = arith.constant 0 : i32
    %c0_i32_0 = arith.constant 0 : i32
    %c0_i32_1 = arith.constant 0 : i32
    return %c0_i32, %c0_i32_0 : i32, i32
  }
}

</mosaic_0001>

<llo_original>
// kernel: _bbox_bounds_device.1
$region0: #{_bbox_bounds_device.1}
  #allocation0 [shape = 'u32[]', space=smem, size = 0x4, offset = 0x4, fixed_abs, tag = 'smem constant byte address 0x4 - core index']
  #allocation1 [shape = 'u32[144,128]{1,0:T(1,128)}', space=vmem, size = 0x12000, scoped, tag = 'internal scratch']
  %s0 = inlined_call_operand.vmem [shape: f32[4,16,16,8], index: 0, kind: input, shape index: {}]
  %s1 = inlined_call_operand.vmem [shape: f32[16,1], index: 1, kind: output, shape index: {0}]
  %s2 = inlined_call_operand.vmem [shape: f32[1,16], index: 2, kind: output, shape index: {1}]
  %s3 = inlined_call_operand.vmem [shape: f32[1,8], index: 3, kind: output, shape index: {2}]
  %4 = xla_tuple %s1, %s2, %s3
  %s5 = sld [smem:[#allocation0]]
  $region34: #{_bbox_bounds_device.1} parent=0
    _
  %s7 = ssub.s32 1, %s5
  %s8 = scalar_select 0, %s7, %s5
  // Predicated region
  $region2: #{_bbox_bounds_device.1} parent=0 // pred_check
    _
  $region3: #{_bbox_bounds_device.1} parent=0 // pred_check_branch
    %10 = sbr.rel (0) target = $region5
  $region4: #{_bbox_bounds_device.1} parent=0 // pred_region
    %s11 = scalar_lea.vmem %s0, 768
  $region5: #{_bbox_bounds_device.1} parent=0 // pred_fallthru
    _
  %s12 = scalar_lea.vmem %s0, 768
  %s13 = scalar_lea.vmem %s0, 768
  %v14 = vld [vmem:[%s13] sm:$0xff]
  %v15 = vld [vmem:[%s13 + $0x8] sm:$0xff]
  %v16 = vld [vmem:[%s13 + $0x10] sm:$0xff]
  %v17 = vld [vmem:[%s13 + $0x18] sm:$0xff]
  %v18 = vld [vmem:[%s13 + $0x20] sm:$0xff]
  %v19 = vld [vmem:[%s13 + $0x28] sm:$0xff]
  %v20 = vld [vmem:[%s13 + $0x30] sm:$0xff]
  %v21 = vld [vmem:[%s13 + $0x38] sm:$0xff]
  %v22 = vld [vmem:[%s13 + $0x40] sm:$0xff]
  %v23 = vld [vmem:[%s13 + $0x48] sm:$0xff]
  %v24 = vld [vmem:[%s13 + $0x50] sm:$0xff]
  %v25 = vld [vmem:[%s13 + $0x58] sm:$0xff]
  %v26 = vld [vmem:[%s13 + $0x60] sm:$0xff]
  %v27 = vld [vmem:[%s13 + $0x68] sm:$0xff]
  %v28 = vld [vmem:[%s13 + $0x70] sm:$0xff]
  %v29 = vld [vmem:[%s13 + $0x78] sm:$0xff]
  %v30 = vld [vmem:[%s13 + $0x80] sm:$0xff]
  %v31 = vld [vmem:[%s13 + $0x88] sm:$0xff]
  %v32 = vld [vmem:[%s13 + $0x90] sm:$0xff]
  %v33 = vld [vmem:[%s13 + $0x98] sm:$0xff]
  %v34 = vld [vmem:[%s13 + $0xa0] sm:$0xff]
  %v35 = vld [vmem:[%s13 + $0xa8] sm:$0xff]
  %v36 = vld [vmem:[%s13 + $0xb0] sm:$0xff]
  %v37 = vld [vmem:[%s13 + $0xb8] sm:$0xff]
  %v38 = vld [vmem:[%s13 + $0xc0] sm:$0xff]
  %v39 = vld [vmem:[%s13 + $0xc8] sm:$0xff]
  %v40 = vld [vmem:[%s13 + $0xd0] sm:$0xff]
  %v41 = vld [vmem:[%s13 + $0xd8] sm:$0xff]
  %v42 = vld [vmem:[%s13 + $0xe0] sm:$0xff]
  %v43 = vld [vmem:[%s13 + $0xe8] sm:$0xff]
  %v44 = vld [vmem:[%s13 + $0xf0] sm:$0xff]
  %v45 = vld [vmem:[%s13 + $0xf8] sm:$0xff]
  %vm46 = vcmask 64512
  %v47 = vsel %vm46, %v14, -inf
  %48 = vmax.xlane.f32.xlu0 %v47
  %v49 = vpop.xlane.xlu0 %48
  %v50 = vsel %vm46, %v15, -inf
  %51 = vmax.xlane.f32.xlu0 %v50
  %v52 = vpop.xlane.xlu0 %51
  %v53 = vsel %vm46, %v16, -inf
  %54 = vmax.xlane.f32.xlu0 %v53
  %v55 = vpop.xlane.xlu0 %54
  %v56 = vsel %vm46, %v17, -inf
  %57 = vmax.xlane.f32.xlu0 %v56
  %v58 = vpop.xlane.xlu0 %57
  %v59 = vsel %vm46, %v18, -inf
  %60 = vmax.xlane.f32.xlu0 %v59
  %v61 = vpop.xlane.xlu0 %60
  %v62 = vsel %vm46, %v19, -inf
  %63 = vmax.xlane.f32.xlu0 %v62
  %v64 = vpop.xlane.xlu0 %63
  %v65 = vsel %vm46, %v20, -inf
  %66 = vmax.xlane.f32.xlu0 %v65
  %v67 = vpop.xlane.xlu0 %66
  %v68 = vsel %vm46, %v21, -inf
  %69 = vmax.xlane.f32.xlu0 %v68
  %v70 = vpop.xlane.xlu0 %69
  %v71 = vsel %vm46, %v22, -inf
  %72 = vmax.xlane.f32.xlu0 %v71
  %v73 = vpop.xlane.xlu0 %72
  %v74 = vsel %vm46, %v23, -inf
  %75 = vmax.xlane.f32.xlu0 %v74
  %v76 = vpop.xlane.xlu0 %75
  %v77 = vsel %vm46, %v24, -inf
  %78 = vmax.xlane.f32.xlu0 %v77
  %v79 = vpop.xlane.xlu0 %78
  %v80 = vsel %vm46, %v25, -inf
  %81 = vmax.xlane.f32.xlu0 %v80
  %v82 = vpop.xlane.xlu0 %81
  %v83 = vsel %vm46, %v26, -inf
  %84 = vmax.xlane.f32.xlu0 %v83
  %v85 = vpop.xlane.xlu0 %84
  %v86 = vsel %vm46, %v27, -inf
  %87 = vmax.xlane.f32.xlu0 %v86
  %v88 = vpop.xlane.xlu0 %87
  %v89 = vsel %vm46, %v28, -inf
  %90 = vmax.xlane.f32.xlu0 %v89
  %v91 = vpop.xlane.xlu0 %90
  %v92 = vsel %vm46, %v29, -inf
  %93 = vmax.xlane.f32.xlu0 %v92
  %v94 = vpop.xlane.xlu0 %93
  %v95 = vsel %vm46, %v30, -inf
  %96 = vmax.xlane.f32.xlu0 %v95
  %v97 = vpop.xlane.xlu0 %96
  %v98 = vsel %vm46, %v31, -inf
  %99 = vmax.xlane.f32.xlu0 %v98
  %v100 = vpop.xlane.xlu0 %99
  %v101 = vsel %vm46, %v32, -inf
  %102 = vmax.xlane.f32.xlu0 %v101
  %v103 = vpop.xlane.xlu0 %102
  %v104 = vsel %vm46, %v33, -inf
  %105 = vmax.xlane.f32.xlu0 %v104
  %v106 = vpop.xlane.xlu0 %105
  %v107 = vsel %vm46, %v34, -inf
  %108 = vmax.xlane.f32.xlu0 %v107
  %v109 = vpop.xlane.xlu0 %108
  %v110 = vsel %vm46, %v35, -inf
  %111 = vmax.xlane.f32.xlu0 %v110
  %v112 = vpop.xlane.xlu0 %111
  %v113 = vsel %vm46, %v36, -inf
  %114 = vmax.xlane.f32.xlu0 %v113
  %v115 = vpop.xlane.xlu0 %114
  %v116 = vsel %vm46, %v37, -inf
  %117 = vmax.xlane.f32.xlu0 %v116
  %v118 = vpop.xlane.xlu0 %117
  %v119 = vsel %vm46, %v38, -inf
  %120 = vmax.xlane.f32.xlu0 %v119
  %v121 = vpop.xlane.xlu0 %120
  %v122 = vsel %vm46, %v39, -inf
  %123 = vmax.xlane.f32.xlu0 %v122
  %v124 = vpop.xlane.xlu0 %123
  %v125 = vsel %vm46, %v40, -inf
  %126 = vmax.xlane.f32.xlu0 %v125
  %v127 = vpop.xlane.xlu0 %126
  %v128 = vsel %vm46, %v41, -inf
  %129 = vmax.xlane.f32.xlu0 %v128
  %v130 = vpop.xlane.xlu0 %129
  %v131 = vsel %vm46, %v42, -inf
  %132 = vmax.xlane.f32.xlu0 %v131
  %v133 = vpop.xlane.xlu0 %132
  %v134 = vsel %vm46, %v43, -inf
  %135 = vmax.xlane.f32.xlu0 %v134
  %v136 = vpop.xlane.xlu0 %135
  %v137 = vsel %vm46, %v44, -inf
  %138 = vmax.xlane.f32.xlu0 %v137
  %v139 = vpop.xlane.xlu0 %138
  %v140 = vsel %vm46, %v45, -inf
  %141 = vmax.xlane.f32.xlu0 %v140
  %v142 = vpop.xlane.xlu0 %141
  %v175 = vlaneseq
  %v176 = vand.u32 %v175, 127
  %v177 = vlaneseq
  %v178 = vshrl.u32 %v177, 7
  %v179 = vsub.s32 %v176, %v178
  %v180 = vrot.slane %v49, %v179
  %v181 = vadd.s32 %v176, 4294967288
  %v182 = vlaneseq
  %v183 = vshrl.u32 %v182, 7
  %v184 = vsub.s32 %v181, %v183
  %v185 = vrot.slane %v52, %v184
  %vm186 = vcmask 130112
  %v187 = vsel %vm186, %v185, %v180
  %v188 = vlaneseq
  %v189 = vshrl.u32 %v188, 7
  %v190 = vsub.s32 %v176, %v189
  %v191 = vrot.slane %v55, %v190
  %v192 = vlaneseq
  %v193 = vshrl.u32 %v192, 7
  %v194 = vsub.s32 %v181, %v193
  %v195 = vrot.slane %v58, %v194
  %v196 = vsel %vm186, %v195, %v191
  %v197 = vlaneseq
  %v198 = vshrl.u32 %v197, 7
  %v199 = vsub.s32 %v176, %v198
  %v200 = vrot.slane %v61, %v199
  %v201 = vlaneseq
  %v202 = vshrl.u32 %v201, 7
  %v203 = vsub.s32 %v181, %v202
  %v204 = vrot.slane %v64, %v203
  %v205 = vsel %vm186, %v204, %v200
  %v206 = vlaneseq
  %v207 = vshrl.u32 %v206, 7
  %v208 = vsub.s32 %v176, %v207
  %v209 = vrot.slane %v67, %v208
  %v210 = vlaneseq
  %v211 = vshrl.u32 %v210, 7
  %v212 = vsub.s32 %v181, %v211
  %v213 = vrot.slane %v70, %v212
  %v214 = vsel %vm186, %v213, %v209
  %v215 = vlaneseq
  %v216 = vshrl.u32 %v215, 7
  %v217 = vsub.s32 %v176, %v216
  %v218 = vrot.slane %v73, %v217
  %v219 = vlaneseq
  %v220 = vshrl.u32 %v219, 7
  %v221 = vsub.s32 %v181, %v220
  %v222 = vrot.slane %v76, %v221
  %v223 = vsel %vm186, %v222, %v218
  %v224 = vlaneseq
  %v225 = vshrl.u32 %v224, 7
  %v226 = vsub.s32 %v176, %v225
  %v227 = vrot.slane %v79, %v226
  %v228 = vlaneseq
  %v229 = vshrl.u32 %v228, 7
  %v230 = vsub.s32 %v181, %v229
  %v231 = vrot.slane %v82, %v230
  %v232 = vsel %vm186, %v231, %v227
  %v233 = vlaneseq
  %v234 = vshrl.u32 %v233, 7
  %v235 = vsub.s32 %v176, %v234
  %v236 = vrot.slane %v85, %v235
  %v237 = vlaneseq
  %v238 = vshrl.u32 %v237, 7
  %v239 = vsub.s32 %v181, %v238
  %v240 = vrot.slane %v88, %v239
  %v241 = vsel %vm186, %v240, %v236
  %v242 = vlaneseq
  %v243 = vshrl.u32 %v242, 7
  %v244 = vsub.s32 %v176, %v243
  %v245 = vrot.slane %v91, %v244
  %v246 = vlaneseq
  %v247 = vshrl.u32 %v246, 7
  %v248 = vsub.s32 %v181, %v247
  %v249 = vrot.slane %v94, %v248
  %v250 = vsel %vm186, %v249, %v245
  %v251 = vlaneseq
  %v252 = vshrl.u32 %v251, 7
  %v253 = vsub.s32 %v176, %v252
  %v254 = vrot.slane %v97, %v253
  %v255 = vlaneseq
  %v256 = vshrl.u32 %v255, 7
  %v257 = vsub.s32 %v181, %v256
  %v258 = vrot.slane %v100, %v257
  %v259 = vsel %vm186, %v258, %v254
  %v260 = vlaneseq
  %v261 = vshrl.u32 %v260, 7
  %v262 = vsub.s32 %v176, %v261
  %v263 = vrot.slane %v103, %v262
  %v264 = vlaneseq
  %v265 = vshrl.u32 %v264, 7
  %v266 = vsub.s32 %v181, %v265
  %v267 = vrot.slane %v106, %v266
  %v268 = vsel %vm186, %v267, %v263
  %v269 = vlaneseq
  %v270 = vshrl.u32 %v269, 7
  %v271 = vsub.s32 %v176, %v270
  %v272 = vrot.slane %v109, %v271
  %v273 = vlaneseq
  %v274 = vshrl.u32 %v273, 7
  %v275 = vsub.s32 %v181, %v274
  %v276 = vrot.slane %v112, %v275
  %v277 = vsel %vm186, %v276, %v272
  %v278 = vlaneseq
  %v279 = vshrl.u32 %v278, 7
  %v280 = vsub.s32 %v176, %v279
  %v281 = vrot.slane %v115, %v280
  %v282 = vlaneseq
  %v283 = vshrl.u32 %v282, 7
  %v284 = vsub.s32 %v181, %v283
  %v285 = vrot.slane %v118, %v284
  %v286 = vsel %vm186, %v285, %v281
  %v287 = vlaneseq
  %v288 = vshrl.u32 %v287, 7
  %v289 = vsub.s32 %v176, %v288
  %v290 = vrot.slane %v121, %v289
  %v291 = vlaneseq
  %v292 = vshrl.u32 %v291, 7
  %v293 = vsub.s32 %v181, %v292
  %v294 = vrot.slane %v124, %v293
  %v295 = vsel %vm186, %v294, %v290
  %v296 = vlaneseq
  %v297 = vshrl.u32 %v296, 7
  %v298 = vsub.s32 %v176, %v297
  %v299 = vrot.slane %v127, %v298
  %v300 = vlaneseq
  %v301 = vshrl.u32 %v300, 7
  %v302 = vsub.s32 %v181, %v301
  %v303 = vrot.slane %v130, %v302
  %v304 = vsel %vm186, %v303, %v299
  %v305 = vlaneseq
  %v306 = vshrl.u32 %v305, 7
  %v307 = vsub.s32 %v176, %v306
  %v308 = vrot.slane %v133, %v307
  %v309 = vlaneseq
  %v310 = vshrl.u32 %v309, 7
  %v311 = vsub.s32 %v181, %v310
  %v312 = vrot.slane %v136, %v311
  %v313 = vsel %vm186, %v312, %v308
  %v314 = vlaneseq
  %v315 = vshrl.u32 %v314, 7
  %v316 = vsub.s32 %v176, %v315
  %v317 = vrot.slane %v139, %v316
  %v318 = vlaneseq
  %v319 = vshrl.u32 %v318, 7
  %v320 = vsub.s32 %v181, %v319
  %v321 = vrot.slane %v142, %v320
  %v322 = vsel %vm186, %v321, %v317
  %vm323 = vcmask 1041409
  %v324 = vsel %vm323, %v196, %v187
  %vm325 = vcmask 1042434
  %v326 = vsel %vm325, %v205, %v324
  %vm327 = vcmask 1043459
  %v328 = vsel %vm327, %v214, %v326
  %vm329 = vcmask 1044484
  %v330 = vsel %vm329, %v223, %v328
  %vm331 = vcmask 1045509
  %v332 = vsel %vm331, %v232, %v330
  %vm333 = vcmask 1046534
  %v334 = vsel %vm333, %v241, %v332
  %vm335 = vcmask 1047559
  %v336 = vsel %vm335, %v250, %v334
  %v337 = vsel %vm323, %v268, %v259
  %v338 = vsel %vm325, %v277, %v337
  %v339 = vsel %vm327, %v286, %v338
  %v340 = vsel %vm329, %v295, %v339
  %v341 = vsel %vm331, %v304, %v340
  %v342 = vsel %vm333, %v313, %v341
  %v343 = vsel %vm335, %v322, %v342
  %vm346 = vcmask 130048
  %v347 = vsel %vm346, %v336, -inf
  %348 = vmax.xlane.f32.xlu0 %v347
  %v349 = vpop.xlane.xlu0 %348
  %v350 = vsel %vm346, %v343, -inf
  %351 = vmax.xlane.f32.xlu0 %v350
  %v352 = vpop.xlane.xlu0 %351
  %vm353 = vcmask 7168
  %354 = vst.msk [vmem:[%s1] sm:$0xff] %vm353, %v349
  %355 = vst.msk [vmem:[%s1 + $0x8] sm:$0xff] %vm353, %v352
  %p356 = scmp.eq.s32.totalorder 0, 0
  // Predicated region
  $region6: #{_bbox_bounds_device.1} parent=0 // pred_check
    %p357 = pneg %p356
  $region7: #{_bbox_bounds_device.1} parent=0 // pred_check_branch
    %359 = sbr.rel (%p357) target = $region9
  $region8: #{_bbox_bounds_device.1} parent=0 // pred_region
    %vm360 = vcmask 122880
    %361 = vst.msk [vmem:[%s2] sm:$0x1] %vm360, 0.0
    %vm362 = vcmask 57344
    %363 = vst.msk [vmem:[%s3] sm:$0x1] %vm362, 0.0
  $region9: #{_bbox_bounds_device.1} parent=0 // pred_fallthru
    _
  %v364 = vld [vmem:[%s2] sm:$0x1]
  %v365 = vmax.f32 %v49, %v61
  %v366 = vmax.f32 %v55, %v67
  %v367 = vmax.f32 %v365, %v73
  %v368 = vmax.f32 %v366, %v79
  %v369 = vmax.f32 %v367, %v85
  %v370 = vmax.f32 %v368, %v91
  %v371 = vmax.f32 %v369, %v97
  %v372 = vmax.f32 %v370, %v103
  %v373 = vmax.f32 %v371, %v109
  %v374 = vmax.f32 %v372, %v115
  %v375 = vmax.f32 %v373, %v121
  %v376 = vmax.f32 %v374, %v127
  %v377 = vmax.f32 %v375, %v133
  %v378 = vmax.f32 %v376, %v139
  %v379 = vmax.f32 %v377, %v378
  %v380 = vmax.f32 %v52, %v64
  %v381 = vmax.f32 %v58, %v70
  %v382 = vmax.f32 %v380, %v76
  %v383 = vmax.f32 %v381, %v82
  %v384 = vmax.f32 %v382, %v88
  %v385 = vmax.f32 %v383, %v94
  %v386 = vmax.f32 %v384, %v100
  %v387 = vmax.f32 %v385, %v106
  %v388 = vmax.f32 %v386, %v112
  %v389 = vmax.f32 %v387, %v118
  %v390 = vmax.f32 %v388, %v124
  %v391 = vmax.f32 %v389, %v130
  %v392 = vmax.f32 %v390, %v136
  %v393 = vmax.f32 %v391, %v142
  %v394 = vmax.f32 %v392, %v393
  %v397 = vlaneseq
  %v398 = vshrl.u32 %v397, 7
  %v399 = vsub.s32 0, %v398
  %v400 = vrot.slane %v379, %v399
  %v401 = vlaneseq
  %v402 = vshrl.u32 %v401, 7
  %v403 = vsub.s32 1, %v402
  %v404 = vrot.slane %v379, %v403
  %v405 = vlaneseq
  %v406 = vshrl.u32 %v405, 7
  %v407 = vsub.s32 2, %v406
  %v408 = vrot.slane %v379, %v407
  %v409 = vlaneseq
  %v410 = vshrl.u32 %v409, 7
  %v411 = vsub.s32 3, %v410
  %v412 = vrot.slane %v379, %v411
  %v413 = vlaneseq
  %v414 = vshrl.u32 %v413, 7
  %v415 = vsub.s32 4, %v414
  %v416 = vrot.slane %v379, %v415
  %v417 = vlaneseq
  %v418 = vshrl.u32 %v417, 7
  %v419 = vsub.s32 5, %v418
  %v420 = vrot.slane %v379, %v419
  %v421 = vlaneseq
  %v422 = vshrl.u32 %v421, 7
  %v423 = vsub.s32 6, %v422
  %v424 = vrot.slane %v379, %v423
  %v425 = vlaneseq
  %v426 = vshrl.u32 %v425, 7
  %v427 = vsub.s32 7, %v426
  %v428 = vrot.slane %v379, %v427
  %v429 = vlaneseq
  %v430 = vshrl.u32 %v429, 7
  %v431 = vsub.s32 0, %v430
  %v432 = vrot.slane %v394, %v431
  %v433 = vlaneseq
  %v434 = vshrl.u32 %v433, 7
  %v435 = vsub.s32 1, %v434
  %v436 = vrot.slane %v394, %v435
  %v437 = vlaneseq
  %v438 = vshrl.u32 %v437, 7
  %v439 = vsub.s32 2, %v438
  %v440 = vrot.slane %v394, %v439
  %v441 = vlaneseq
  %v442 = vshrl.u32 %v441, 7
  %v443 = vsub.s32 3, %v442
  %v444 = vrot.slane %v394, %v443
  %v445 = vlaneseq
  %v446 = vshrl.u32 %v445, 7
  %v447 = vsub.s32 4, %v446
  %v448 = vrot.slane %v394, %v447
  %v449 = vlaneseq
  %v450 = vshrl.u32 %v449, 7
  %v451 = vsub.s32 5, %v450
  %v452 = vrot.slane %v394, %v451
  %v453 = vlaneseq
  %v454 = vshrl.u32 %v453, 7
  %v455 = vsub.s32 6, %v454
  %v456 = vrot.slane %v394, %v455
  %v457 = vlaneseq
  %v458 = vshrl.u32 %v457, 7
  %v459 = vsub.s32 7, %v458
  %v460 = vrot.slane %v394, %v459
  %v461 = vcombine.low %v400, %v404
  %v462 = vcombine.low %v408, %v412
  %v463 = vcombine.low %v416, %v420
  %v464 = vcombine.low %v424, %v428
  %v466 = vunpack.c.l.s4 1966171168
  %v467 = vunpack.c.0.s8 %v466
  %v468 = vlaneseq
  %v469 = vshrl.u32 %v468, 7
  %v470 = vsub.s32 %v467, %v469
  %v471 = vrot.slane %v461, %v470
  %v473 = vunpack.c.l.s4 1966171168
  %v474 = vunpack.c.0.s8 %v473
  %v475 = vlaneseq
  %v476 = vshrl.u32 %v475, 7
  %v477 = vsub.s32 %v474, %v476
  %v478 = vrot.slane %v462, %v477
  %v480 = vunpack.c.l.s4 1966171168
  %v481 = vunpack.c.0.s8 %v480
  %v482 = vlaneseq
  %v483 = vshrl.u32 %v482, 7
  %v484 = vsub.s32 %v481, %v483
  %v485 = vrot.slane %v463, %v484
  %v487 = vunpack.c.l.s4 1966171168
  %v488 = vunpack.c.0.s8 %v487
  %v489 = vlaneseq
  %v490 = vshrl.u32 %v489, 7
  %v491 = vsub.s32 %v488, %v490
  %v492 = vrot.slane %v464, %v491
  %v493 = vcombine.low %v471, %v478
  %v494 = vcombine.low %v485, %v492
  %v496 = vunpack.c.l.s4 1966171168
  %v497 = vunpack.c.0.s8 %v496
  %v498 = vlaneseq
  %v499 = vshrl.u32 %v498, 7
  %v500 = vsub.s32 %v497, %v499
  %v501 = vrot.slane %v493, %v500
  %v503 = vunpack.c.l.s4 1966171168
  %v504 = vunpack.c.0.s8 %v503
  %v505 = vlaneseq
  %v506 = vshrl.u32 %v505, 7
  %v507 = vsub.s32 %v504, %v506
  %v508 = vrot.slane %v494, %v507
  %v509 = vcombine.low %v501, %v508
  %v510 = vcombine.low %v432, %v436
  %v511 = vcombine.low %v440, %v444
  %v512 = vcombine.low %v448, %v452
  %v513 = vcombine.low %v456, %v460
  %v515 = vunpack.c.l.s4 1966171168
  %v516 = vunpack.c.0.s8 %v515
  %v517 = vlaneseq
  %v518 = vshrl.u32 %v517, 7
  %v519 = vsub.s32 %v516, %v518
  %v520 = vrot.slane %v510, %v519
  %v522 = vunpack.c.l.s4 1966171168
  %v523 = vunpack.c.0.s8 %v522
  %v524 = vlaneseq
  %v525 = vshrl.u32 %v524, 7
  %v526 = vsub.s32 %v523, %v525
  %v527 = vrot.slane %v511, %v526
  %v529 = vunpack.c.l.s4 1966171168
  %v530 = vunpack.c.0.s8 %v529
  %v531 = vlaneseq
  %v532 = vshrl.u32 %v531, 7
  %v533 = vsub.s32 %v530, %v532
  %v534 = vrot.slane %v512, %v533
  %v536 = vunpack.c.l.s4 1966171168
  %v537 = vunpack.c.0.s8 %v536
  %v538 = vlaneseq
  %v539 = vshrl.u32 %v538, 7
  %v540 = vsub.s32 %v537, %v539
  %v541 = vrot.slane %v513, %v540
  %v542 = vcombine.low %v520, %v527
  %v543 = vcombine.low %v534, %v541
  %v545 = vunpack.c.l.s4 1966171168
  %v546 = vunpack.c.0.s8 %v545
  %v547 = vlaneseq
  %v548 = vshrl.u32 %v547, 7
  %v549 = vsub.s32 %v546, %v548
  %v550 = vrot.slane %v542, %v549
  %v552 = vunpack.c.l.s4 1966171168
  %v553 = vunpack.c.0.s8 %v552
  %v554 = vlaneseq
  %v555 = vshrl.u32 %v554, 7
  %v556 = vsub.s32 %v553, %v555
  %v557 = vrot.slane %v543, %v556
  %v558 = vcombine.low %v550, %v557
  %559 = vset.pattern.permute.xlu0 0
  %560 = vperm.xlu0 %559, %v509
  %v561 = vpop.permute.xlu0 %560
  %562 = vset.pattern.permute.xlu0 0
  %563 = vperm.xlu0 %562, %v558
  %v564 = vpop.permute.xlu0 %563
  %v565 = vlaneseq
  %v566 = vshrl.u32 %v565, 7
  %v567 = vsub.s32 %v176, %v566
  %v568 = vrot.slane %v561, %v567
  %v569 = vlaneseq
  %v570 = vshrl.u32 %v569, 7
  %v571 = vsub.s32 %v181, %v570
  %v572 = vrot.slane %v564, %v571
  %v573 = vsel %vm186, %v572, %v568
  %v575 = vunpack.c.l.s4 1966171168
  %v576 = vunpack.c.0.s8 %v575
  %v577 = vlaneseq
  %v578 = vshrl.u32 %v577, 7
  %v579 = vsub.s32 %v576, %v578
  %v580 = vrot.slane %v573, %v579
  %v582 = vunpack.c.l.s4 1966171168
  %v583 = vunpack.c.0.s8 %v582
  %v584 = vlaneseq
  %v585 = vshrl.u32 %v584, 7
  %v586 = vsub.s32 %v583, %v585
  %v587 = vrot.slane %v580, %v586
  %v589 = vmax.f32 %v364, %v587
  %vm590 = vcmask 122880
  %591 = vst.msk [vmem:[%s2] sm:$0x1] %vm590, %v589
  %v592 = vmax.f32 %v47, %v59
  %v593 = vmax.f32 %v53, %v65
  %v594 = vmax.f32 %v592, %v71
  %v595 = vmax.f32 %v593, %v77
  %v596 = vmax.f32 %v594, %v83
  %v597 = vmax.f32 %v595, %v89
  %v598 = vmax.f32 %v596, %v95
  %v599 = vmax.f32 %v597, %v101
  %v600 = vmax.f32 %v598, %v107
  %v601 = vmax.f32 %v599, %v113
  %v602 = vmax.f32 %v600, %v119
  %v603 = vmax.f32 %v601, %v125
  %v604 = vmax.f32 %v602, %v131
  %v605 = vmax.f32 %v603, %v137
  %v606 = vmax.f32 %v604, %v605
  %v607 = vmax.f32 %v50, %v62
  %v608 = vmax.f32 %v56, %v68
  %v609 = vmax.f32 %v607, %v74
  %v610 = vmax.f32 %v608, %v80
  %v611 = vmax.f32 %v609, %v86
  %v612 = vmax.f32 %v610, %v92
  %v613 = vmax.f32 %v611, %v98
  %v614 = vmax.f32 %v612, %v104
  %v615 = vmax.f32 %v613, %v110
  %v616 = vmax.f32 %v614, %v116
  %v617 = vmax.f32 %v615, %v122
  %v618 = vmax.f32 %v616, %v128
  %v619 = vmax.f32 %v617, %v134
  %v620 = vmax.f32 %v618, %v140
  %v621 = vmax.f32 %v619, %v620
  %v622 = vld [vmem:[%s3] sm:$0x1]
  %v623 = vsel %vm46, %v606, -inf
  %v624 = vsel %vm46, %v621, -inf
  %v625 = vmax.f32 %v623, %v624
  %v626 = vrot.slane %v625, 4
  %v627 = vmax.f32 %v625, %v626
  %v628 = vrot.slane %v627, 2
  %v629 = vmax.f32 %v627, %v628
  %v630 = vrot.slane %v629, 1
  %v631 = vmax.f32 %v629, %v630
  %v632 = vmax.f32 %v622, %v631
  %vm633 = vcmask 57344
  %634 = vst.msk [vmem:[%s3] sm:$0x1] %vm633, %v632
  // Predicated region
  $region10: #{_bbox_bounds_device.1} parent=0 // pred_check
    _
  $region11: #{_bbox_bounds_device.1} parent=0 // pred_check_branch
    %636 = sbr.rel (0) target = $region13
  $region12: #{_bbox_bounds_device.1} parent=0 // pred_region
    _
  $region13: #{_bbox_bounds_device.1} parent=0 // pred_fallthru
    _
  // Predicated region
  $region14: #{_bbox_bounds_device.1} parent=0 // pred_check
    _
  $region15: #{_bbox_bounds_device.1} parent=0 // pred_check_branch
    %638 = sbr.rel (0) target = $region17
  $region16: #{_bbox_bounds_device.1} parent=0 // pred_region
    _
  $region17: #{_bbox_bounds_device.1} parent=0 // pred_fallthru
    _
  // Predicated region
  $region18: #{_bbox_bounds_device.1} parent=0 // pred_check
    _
  $region19: #{_bbox_bounds_device.1} parent=0 // pred_check_branch
    %640 = sbr.rel (0) target = $region21
  $region20: #{_bbox_bounds_device.1} parent=0 // pred_region
    _
  $region21: #{_bbox_bounds_device.1} parent=0 // pred_fallthru
    _
  // Predicated region
  $region22: #{_bbox_bounds_device.1} parent=0 // pred_check
    _
  $region23: #{_bbox_bounds_device.1} parent=0 // pred_check_branch
    %642 = sbr.rel (0) target = $region25
  $region24: #{_bbox_bounds_device.1} parent=0 // pred_region
    _
  $region25: #{_bbox_bounds_device.1} parent=0 // pred_fallthru
    _
  // Predicated region
  $region26: #{_bbox_bounds_device.1} parent=0 // pred_check
    _
  $region27: #{_bbox_bounds_device.1} parent=0 // pred_check_branch
    %644 = sbr.rel (0) target = $region29
  $region28: #{_bbox_bounds_device.1} parent=0 // pred_region
    _
  $region29: #{_bbox_bounds_device.1} parent=0 // pred_fallthru
    _
  // Predicated region
  $region30: #{_bbox_bounds_device.1} parent=0 // pred_check
    _
  $region31: #{_bbox_bounds_device.1} parent=0 // pred_check_branch
    %646 = sbr.rel (0) target = $region33
  $region32: #{_bbox_bounds_device.1} parent=0 // pred_region
    _
  $region33: #{_bbox_bounds_device.1} parent=0 // pred_fallthru
    _

</llo_original>
